<compile_context>
chip_gen: v5e
topology: v5e:2x2
jax: 0.10.0
libtpu: 0.0.40
codegen_flags: <defaults>
</compile_context>

<pallas_src>
import functools

import jax
import jax.numpy as jnp
from jax.experimental import pallas as pl
from jax.experimental.pallas import tpu as pltpu


def _round_up(x, m):
    return (x + m - 1) // m * m


# ---------------------------------------------------------------------------
# Fused Pallas kernel: whole VAE forward for one batch tile.
#   inputs : x (tile, D_in), eps (tile, latent),
#            w_packed (rows, max_n) weight_dtype, b_packed (>=8, max_n) f32
#   outputs: recon (tile, D_in), enc_out (tile, 2*latent)
# ---------------------------------------------------------------------------
def _fused_vae_kernel(x_ref, eps_ref, w_ref, b_ref, recon_ref, enc_out_ref,
                      *, layer_meta, n_enc, n_dec, latent_dim, act_dtype):

    def dense(h, idx, out_dtype):
        row_off, k, n = layer_meta[idx]
        w = w_ref[row_off:row_off + k, :n]            # static slice (free view)
        b = b_ref[idx:idx + 1, :n]                    # (1, n) f32
        y = jnp.dot(h.astype(w.dtype), w,             # MXU, f32 accumulation
                    preferred_element_type=jnp.float32)
        return (y + b).astype(out_dtype)

    # ---- encoder ----
    h = x_ref[...]                                    # no redundant f32 cast
    for i in range(n_enc):
        last = (i + 1 == n_enc)
        y = dense(h, i, jnp.float32 if last else act_dtype)
        h = y if last else jnp.maximum(y, 0.0)        # ReLU (no ReLU on last)
    # TODO(synk): encoder/decoder/latent dropouts are identity (eval mode).

    # ---- mu / log_var (== .view(-1, 2, latent) row-major split) ----
    enc_out_ref[...] = h.astype(enc_out_ref.dtype)    # single wider store
    mu = h[:, :latent_dim]
    log_var = h[:, latent_dim:]

    # ---- reparameterize: z = mu + eps * exp(0.5 * log_var) ----
    z = mu + eps_ref[...].astype(jnp.float32) * jnp.exp(0.5 * log_var)

    # ---- decoder ----
    x = z
    for i in range(n_dec):
        idx = n_enc + i
        last = (i + 1 == n_dec)
        y = dense(x, idx, jnp.float32 if last else act_dtype)
        x = jax.nn.sigmoid(y) if last else jnp.maximum(y, 0.0)

    recon_ref[...] = x.astype(recon_ref.dtype)


# ---------------------------------------------------------------------------
# Parameter packing + chip gating + tile selection
# ---------------------------------------------------------------------------
def pack_params(enc_params, dec_params, weight_dtype=jnp.bfloat16):
    """Stack all (w, b) into one weight slab + one bias slab (+ static metas)."""
    layers = list(enc_params) + list(dec_params)
    max_n = _round_up(max(w.shape[1] for w, _ in layers), 128)
    metas, blocks, row_off = [], [], 0
    for (w, _) in layers:
        k, n = w.shape
        k_pad = _round_up(k, 8)                       # sublane-aligned rows
        blk = jnp.zeros((k_pad, max_n), weight_dtype)
        blk = blk.at[:k, :n].set(w.astype(weight_dtype))
        blocks.append(blk)
        metas.append((row_off, k, n))
        row_off += k_pad
    w_packed = jnp.concatenate(blocks, axis=0)
    b_packed = jnp.zeros((_round_up(len(layers), 8), max_n), jnp.float32)
    for i, (_, b) in enumerate(layers):
        b_packed = b_packed.at[i, :b.shape[0]].set(b.astype(jnp.float32))
    return w_packed, b_packed, tuple(metas)


def _default_act_dtype():
    """bf16 activations on v6e/v7x; f32 on v5e and older (no bf16 VPU/EUP)."""
    try:
        kind = jax.devices()[0].device_kind.lower()
    except Exception:
        return jnp.float32
    if any(tag in kind for tag in ("v2", "v3", "v4", "v5")):
        return jnp.float32
    return jnp.bfloat16


def _choose_batch_tile(m):
    if m <= 8:
        return 8
    if m <= 1024:
        # >= 2 grid steps whenever possible so ("parallel",) can use both
        # TensorCores on v7x; keep tile a multiple of 8 (f32 sublane).
        return min(512, _round_up((m + 1) // 2, 8))
    return 512


# ---------------------------------------------------------------------------
# Wrapper: one pallas_call for the whole forward
# ---------------------------------------------------------------------------
def linear_vae_forward(X, enc_params, dec_params, latent_dim, eps, *,
                       batch_tile=None, weight_dtype=jnp.bfloat16,
                       act_dtype=None):
    """Mirrors LinearVAE.forward (dropouts = identity / eval mode).

    X: (M, input_output_dim);  eps: (M, latent_dim) standard-normal sample.
    Returns (reconstruction, mu, log_var).
    """
    M, D_in = X.shape
    n_enc, n_dec = len(enc_params), len(dec_params)
    if act_dtype is None:
        act_dtype = _default_act_dtype()
    if batch_tile is None:
        batch_tile = _choose_batch_tile(M)

    w_packed, b_packed, metas = pack_params(enc_params, dec_params, weight_dtype)

    # Zero-pad ragged batches instead of falling back to one giant tile.
    num_tiles = (M + batch_tile - 1) // batch_tile
    m_pad = num_tiles * batch_tile
    if m_pad != M:
        X_in = jnp.zeros((m_pad, D_in), X.dtype).at[:M].set(X)
        eps_in = jnp.zeros((m_pad, latent_dim), eps.dtype).at[:M].set(eps)
    else:
        X_in, eps_in = X, eps

    in_specs = [
        pl.BlockSpec((batch_tile, D_in), lambda i: (i, 0)),
        pl.BlockSpec((batch_tile, latent_dim), lambda i: (i, 0)),
        # Packed weights/biases: whole array, VMEM-resident across the grid.
        # (Could also be single-buffered via pipeline_mode=pl.Buffered(1).)
        pl.BlockSpec(w_packed.shape, lambda i: (0, 0)),
        pl.BlockSpec(b_packed.shape, lambda i: (0, 0)),
    ]
    out_shape = (
        jax.ShapeDtypeStruct((m_pad, D_in), X.dtype),           # recon
        jax.ShapeDtypeStruct((m_pad, 2 * latent_dim), X.dtype),  # [mu|log_var]
    )
    out_specs = (
        pl.BlockSpec((batch_tile, D_in), lambda i: (i, 0)),
        pl.BlockSpec((batch_tile, 2 * latent_dim), lambda i: (i, 0)),
    )

    itemsize = jnp.dtype(X.dtype).itemsize
    flops = 2 * m_pad * sum(k * n for (_, k, n) in metas)
    transcendentals = m_pad * (latent_dim + D_in)               # exp + sigmoid
    bytes_accessed = (X_in.nbytes + eps_in.nbytes + w_packed.nbytes
                      + b_packed.nbytes
                      + m_pad * D_in * itemsize
                      + m_pad * 2 * latent_dim * itemsize)

    kernel = functools.partial(
        _fused_vae_kernel, layer_meta=metas, n_enc=n_enc, n_dec=n_dec,
        latent_dim=latent_dim, act_dtype=act_dtype)

    recon, enc_out = pl.pallas_call(
        kernel,
        out_shape=out_shape,
        grid_spec=pltpu.PrefetchScalarGridSpec(
            num_scalar_prefetch=0,
            grid=(num_tiles,),
            in_specs=in_specs,
            out_specs=out_specs,
        ),
        compiler_params=pltpu.CompilerParams(
            dimension_semantics=("parallel",),
            # Above v5e's 16 MiB default scoped VMEM; within v6e/v7x defaults.
            vmem_limit_bytes=32 * 1024 * 1024,
        ),
        cost_estimate=pl.CostEstimate(
            flops=flops, transcendentals=transcendentals,
            bytes_accessed=bytes_accessed),
    )(X_in, eps_in, w_packed, b_packed)

    recon = recon[:M]
    mu = enc_out[:M, :latent_dim]
    log_var = enc_out[:M, latent_dim:]
    return recon, mu, log_var


# ---------------------------------------------------------------------------
# Parameter construction (PyTorch-style init) and pure-JAX reference
# ---------------------------------------------------------------------------
def init_linear(key, in_f, out_f, dtype=jnp.float32):
    """PyTorch uniform(-1/sqrt(in), 1/sqrt(in)) init, stored as (in, out)."""
    kw, kb = jax.random.split(key)
    bound = 1.0 / jnp.sqrt(jnp.asarray(in_f, dtype))
    w = jax.random.uniform(kw, (in_f, out_f), dtype, -bound, bound)
    b = jax.random.uniform(kb, (out_f,), dtype, -bound, bound)
    return w, b


def build_params(key, input_output_dim, encoding_dim, latent_dim, decoding_dim):
    keys = jax.random.split(key, 16)
    k = iter(keys)
    enc = []
    dims = [input_output_dim] + list(encoding_dim)
    for i in range(len(encoding_dim)):
        enc.append(init_linear(next(k), dims[i], dims[i + 1]))
    enc.append(init_linear(next(k), encoding_dim[-1], 2 * latent_dim))
    dec = []
    dims = [latent_dim] + list(decoding_dim)
    for i in range(len(decoding_dim)):
        dec.append(init_linear(next(k), dims[i], dims[i + 1]))
    dec.append(init_linear(next(k), decoding_dim[-1], input_output_dim))
    return enc, dec


def _reference_forward(X, enc_params, dec_params, latent_dim, eps,
                       weight_dtype=jnp.bfloat16, act_dtype=None):
    """Pure-JAX reference with the same precision strategy as the kernel."""
    if act_dtype is None:
        act_dtype = _default_act_dtype()

    def dense(h, w, b, out_dtype):
        y = jnp.dot(h.astype(weight_dtype), w.astype(weight_dtype),
                    preferred_element_type=jnp.float32)
        return (y + b.astype(jnp.float32)).astype(out_dtype)

    n_enc, n_dec = len(enc_params), len(dec_params)
    h = X
    for i, (w, b) in enumerate(enc_params):
        last = (i + 1 == n_enc)
        y = dense(h, w, b, jnp.float32 if last else act_dtype)
        h = y if last else jnp.maximum(y, 0.0)
    mu, log_var = h[:, :latent_dim], h[:, latent_dim:]
    z = mu + eps * jnp.exp(0.5 * log_var)
    x = z
    for i, (w, b) in enumerate(dec_params):
        last = (i + 1 == n_dec)
        y = dense(x, w, b, jnp.float32 if last else act_dtype)
        x = jax.nn.sigmoid(y) if last else jnp.maximum(y, 0.0)
    return x.astype(X.dtype), mu.astype(X.dtype), log_var.astype(X.dtype)


# ---------------------------------------------------------------------------
if __name__ == "__main__":
    batch = 8
    input_output_dim = 256
    encoding_dim = [128, 64]
    latent_dim = 32
    decoding_dim = [64, 128]

    root = jax.random.PRNGKey(0)
    k_params, k_x, k_eps, k_x2, k_eps2 = jax.random.split(root, 5)

    enc_params, dec_params = build_params(
        k_params, input_output_dim, encoding_dim, latent_dim, decoding_dim)

    X = jax.random.uniform(k_x, (batch, input_output_dim), jnp.float32)
    eps = jax.random.normal(k_eps, (batch, latent_dim), jnp.float32)

    recon, mu, log_var = linear_vae_forward(X, enc_params, dec_params,
                                            latent_dim, eps)
    jax.block_until_ready((recon, mu, log_var))

    assert recon.shape == (batch, input_output_dim)
    assert mu.shape == (batch, latent_dim)
    assert log_var.shape == (batch, latent_dim)
    assert bool(jnp.all(jnp.isfinite(recon)))
    assert bool(jnp.all((recon >= 0.0) & (recon <= 1.0)))   # sigmoid range

    ref_recon, ref_mu, ref_logvar = _reference_forward(
        X, enc_params, dec_params, latent_dim, eps)
    assert bool(jnp.allclose(recon, ref_recon, rtol=2e-2, atol=2e-2))
    assert bool(jnp.allclose(mu, ref_mu, rtol=2e-2, atol=2e-2))
    assert bool(jnp.allclose(log_var, ref_logvar, rtol=2e-2, atol=2e-2))

    # Ragged batch: exercises the zero-padded tail + 2-step "parallel" grid.
    M2 = 20
    X2 = jax.random.uniform(k_x2, (M2, input_output_dim), jnp.float32)
    eps2 = jax.random.normal(k_eps2, (M2, latent_dim), jnp.float32)
    r2, m2, lv2 = linear_vae_forward(X2, enc_params, dec_params,
                                     latent_dim, eps2)
    jax.block_until_ready((r2, m2, lv2))
    rr2, rm2, rlv2 = _reference_forward(X2, enc_params, dec_params,
                                        latent_dim, eps2)
    assert r2.shape == (M2, input_output_dim)
    assert bool(jnp.allclose(r2, rr2, rtol=2e-2, atol=2e-2))
    assert bool(jnp.allclose(m2, rm2, rtol=2e-2, atol=2e-2))
    assert bool(jnp.allclose(lv2, rlv2, rtol=2e-2, atol=2e-2))

    print("KERNEL_OK")
</pallas_src>

<mosaic_0001>
module attributes {stable_mosaic.version = 11 : i64} {
  func.func @_fused_vae_kernel(%arg0: i32, %arg1: memref<8x256xf32, #tpu.memory_space<vmem>>, %arg2: memref<8x32xf32, #tpu.memory_space<vmem>>, %arg3: memref<672x256xbf16, #tpu.memory_space<vmem>>, %arg4: memref<8x256xf32, #tpu.memory_space<vmem>>, %arg5: memref<8x256xf32, #tpu.memory_space<vmem>>, %arg6: memref<8x64xf32, #tpu.memory_space<vmem>>) attributes {dimension_semantics = [#tpu.dimension_semantics<parallel>], iteration_bounds = array<i64: 1>, scalar_prefetch = 0 : i64, scratch_operands = 0 : i64, tpu.core_type = #tpu.core_type<tc>, window_params = [{transform_indices = @transform_0, window_bounds = array<i64: 8, 256>}, {transform_indices = @transform_1, window_bounds = array<i64: 8, 32>}, {pipeline_mode = #tpu.pipeline_mode<synchronous>, transform_indices = @transform_2, window_bounds = array<i64: 672, 256>}, {pipeline_mode = #tpu.pipeline_mode<synchronous>, transform_indices = @transform_3, window_bounds = array<i64: 8, 256>}, {transform_indices = @transform_4, window_bounds = array<i64: 8, 256>}, {transform_indices = @transform_5, window_bounds = array<i64: 8, 64>}]} {
    %c0 = arith.constant 0 : index
    %c0_0 = arith.constant 0 : index
    %0 = vector.load %arg1[%c0, %c0_0] : memref<8x256xf32, #tpu.memory_space<vmem>>, vector<8x256xf32>
    %c0_1 = arith.constant 0 : index
    %c0_2 = arith.constant 0 : index
    %1 = vector.load %arg3[%c0_1, %c0_2] : memref<672x256xbf16, #tpu.memory_space<vmem>>, vector<256x128xbf16>
    %c0_3 = arith.constant 0 : index
    %c0_4 = arith.constant 0 : index
    %2 = vector.load %arg4[%c0_3, %c0_4] : memref<8x256xf32, #tpu.memory_space<vmem>>, vector<1x128xf32>
    %3 = arith.truncf %0 : vector<8x256xf32> to vector<8x256xbf16>
    %cst = arith.constant dense<0.000000e+00> : vector<8x128xf32>
    %4 = tpu.matmul %3, %1, %cst {dimension_numbers = #tpu.dot_dimension_numbers<[1], [0], [0], [1], [0, 0, 1, 1], [], []>} : vector<8x256xbf16>, vector<256x128xbf16>, vector<8x128xf32> -> vector<8x128xf32>
    %5 = vector.broadcast %2 : vector<1x128xf32> to vector<8x128xf32>
    %6 = arith.addf %4, %5 : vector<8x128xf32>
    %7 = arith.truncf %6 : vector<8x128xf32> to vector<8x128xbf16>
    %cst_5 = arith.constant 0.000000e+00 : bf16
    %8 = vector.broadcast %cst_5 : bf16 to vector<8x128xbf16>
    %9 = arith.maximumf %7, %8 : vector<8x128xbf16>
    %c256 = arith.constant 256 : index
    %c0_6 = arith.constant 0 : index
    %10 = vector.load %arg3[%c256, %c0_6] : memref<672x256xbf16, #tpu.memory_space<vmem>>, vector<128x64xbf16>
    %c1 = arith.constant 1 : index
    %c0_7 = arith.constant 0 : index
    %11 = vector.load %arg4[%c1, %c0_7] : memref<8x256xf32, #tpu.memory_space<vmem>>, vector<1x64xf32>
    %cst_8 = arith.constant dense<0.000000e+00> : vector<8x64xf32>
    %12 = tpu.matmul %9, %10, %cst_8 {dimension_numbers = #tpu.dot_dimension_numbers<[1], [0], [0], [1], [0, 0, 1, 1], [], []>} : vector<8x128xbf16>, vector<128x64xbf16>, vector<8x64xf32> -> vector<8x64xf32>
    %13 = vector.broadcast %11 : vector<1x64xf32> to vector<8x64xf32>
    %14 = arith.addf %12, %13 : vector<8x64xf32>
    %15 = arith.truncf %14 : vector<8x64xf32> to vector<8x64xbf16>
    %cst_9 = arith.constant 0.000000e+00 : bf16
    %16 = vector.broadcast %cst_9 : bf16 to vector<8x64xbf16>
    %17 = arith.maximumf %15, %16 : vector<8x64xbf16>
    %c384 = arith.constant 384 : index
    %c0_10 = arith.constant 0 : index
    %18 = vector.load %arg3[%c384, %c0_10] : memref<672x256xbf16, #tpu.memory_space<vmem>>, vector<64x64xbf16>
    %c2 = arith.constant 2 : index
    %c0_11 = arith.constant 0 : index
    %19 = vector.load %arg4[%c2, %c0_11] : memref<8x256xf32, #tpu.memory_space<vmem>>, vector<1x64xf32>
    %cst_12 = arith.constant dense<0.000000e+00> : vector<8x64xf32>
    %20 = tpu.matmul %17, %18, %cst_12 {dimension_numbers = #tpu.dot_dimension_numbers<[1], [0], [0], [1], [0, 0, 1, 1], [], []>} : vector<8x64xbf16>, vector<64x64xbf16>, vector<8x64xf32> -> vector<8x64xf32>
    %21 = vector.broadcast %19 : vector<1x64xf32> to vector<8x64xf32>
    %22 = arith.addf %20, %21 : vector<8x64xf32>
    %c0_13 = arith.constant 0 : index
    %c0_14 = arith.constant 0 : index
    %23 = vector.load %arg6[%c0_13, %c0_14] : memref<8x64xf32, #tpu.memory_space<vmem>>, vector<8x64xf32>
    tpu.vector_store %arg6[%c0_13, %c0_14], %22 {strides = array<i32>} : memref<8x64xf32, #tpu.memory_space<vmem>>, vector<8x64xf32>,
    %24 = vector.extract_strided_slice %22 {offsets = [0, 0], sizes = [8, 32], strides = [1, 1]} : vector<8x64xf32> to vector<8x32xf32>
    %25 = vector.extract_strided_slice %22 {offsets = [0, 32], sizes = [8, 32], strides = [1, 1]} : vector<8x64xf32> to vector<8x32xf32>
    %c0_15 = arith.constant 0 : index
    %c0_16 = arith.constant 0 : index
    %26 = vector.load %arg2[%c0_15, %c0_16] : memref<8x32xf32, #tpu.memory_space<vmem>>, vector<8x32xf32>
    %cst_17 = arith.constant 5.000000e-01 : f32
    %27 = vector.broadcast %cst_17 : f32 to vector<8x32xf32>
    %28 = arith.mulf %27, %25 : vector<8x32xf32>
    %29 = math.exp %28 : vector<8x32xf32>
    %30 = arith.mulf %26, %29 : vector<8x32xf32>
    %31 = arith.addf %24, %30 : vector<8x32xf32>
    %c448 = arith.constant 448 : index
    %c0_18 = arith.constant 0 : index
    %32 = vector.load %arg3[%c448, %c0_18] : memref<672x256xbf16, #tpu.memory_space<vmem>>, vector<32x64xbf16>
    %c3 = arith.constant 3 : index
    %c0_19 = arith.constant 0 : index
    %33 = vector.load %arg4[%c3, %c0_19] : memref<8x256xf32, #tpu.memory_space<vmem>>, vector<1x64xf32>
    %34 = arith.truncf %31 : vector<8x32xf32> to vector<8x32xbf16>
    %cst_20 = arith.constant dense<0.000000e+00> : vector<8x64xf32>
    %35 = tpu.matmul %34, %32, %cst_20 {dimension_numbers = #tpu.dot_dimension_numbers<[1], [0], [0], [1], [0, 0, 1, 1], [], []>} : vector<8x32xbf16>, vector<32x64xbf16>, vector<8x64xf32> -> vector<8x64xf32>
    %36 = vector.broadcast %33 : vector<1x64xf32> to vector<8x64xf32>
    %37 = arith.addf %35, %36 : vector<8x64xf32>
    %38 = arith.truncf %37 : vector<8x64xf32> to vector<8x64xbf16>
    %cst_21 = arith.constant 0.000000e+00 : bf16
    %39 = vector.broadcast %cst_21 : bf16 to vector<8x64xbf16>
    %40 = arith.maximumf %38, %39 : vector<8x64xbf16>
    %c480 = arith.constant 480 : index
    %c0_22 = arith.constant 0 : index
    %41 = vector.load %arg3[%c480, %c0_22] : memref<672x256xbf16, #tpu.memory_space<vmem>>, vector<64x128xbf16>
    %c4 = arith.constant 4 : index
    %c0_23 = arith.constant 0 : index
    %42 = vector.load %arg4[%c4, %c0_23] : memref<8x256xf32, #tpu.memory_space<vmem>>, vector<1x128xf32>
    %cst_24 = arith.constant dense<0.000000e+00> : vector<8x128xf32>
    %43 = tpu.matmul %40, %41, %cst_24 {dimension_numbers = #tpu.dot_dimension_numbers<[1], [0], [0], [1], [0, 0, 1, 1], [], []>} : vector<8x64xbf16>, vector<64x128xbf16>, vector<8x128xf32> -> vector<8x128xf32>
    %44 = vector.broadcast %42 : vector<1x128xf32> to vector<8x128xf32>
    %45 = arith.addf %43, %44 : vector<8x128xf32>
    %46 = arith.truncf %45 : vector<8x128xf32> to vector<8x128xbf16>
    %cst_25 = arith.constant 0.000000e+00 : bf16
    %47 = vector.broadcast %cst_25 : bf16 to vector<8x128xbf16>
    %48 = arith.maximumf %46, %47 : vector<8x128xbf16>
    %c544 = arith.constant 544 : index
    %c0_26 = arith.constant 0 : index
    %49 = vector.load %arg3[%c544, %c0_26] : memref<672x256xbf16, #tpu.memory_space<vmem>>, vector<128x256xbf16>
    %c5 = arith.constant 5 : index
    %c0_27 = arith.constant 0 : index
    %50 = vector.load %arg4[%c5, %c0_27] : memref<8x256xf32, #tpu.memory_space<vmem>>, vector<1x256xf32>
    %cst_28 = arith.constant dense<0.000000e+00> : vector<8x256xf32>
    %51 = tpu.matmul %48, %49, %cst_28 {dimension_numbers = #tpu.dot_dimension_numbers<[1], [0], [0], [1], [0, 0, 1, 1], [], []>} : vector<8x128xbf16>, vector<128x256xbf16>, vector<8x256xf32> -> vector<8x256xf32>
    %52 = vector.broadcast %50 : vector<1x256xf32> to vector<8x256xf32>
    %53 = arith.addf %51, %52 : vector<8x256xf32>
    %54 = arith.negf %53 : vector<8x256xf32>
    %55 = math.exp %54 : vector<8x256xf32>
    %cst_29 = arith.constant 1.000000e+00 : f32
    %56 = vector.broadcast %cst_29 : f32 to vector<8x256xf32>
    %57 = arith.addf %56, %55 : vector<8x256xf32>
    %58 = arith.divf %56, %57 : vector<8x256xf32>
    %c0_30 = arith.constant 0 : index
    %c0_31 = arith.constant 0 : index
    %59 = vector.load %arg5[%c0_30, %c0_31] : memref<8x256xf32, #tpu.memory_space<vmem>>, vector<8x256xf32>
    tpu.vector_store %arg5[%c0_30, %c0_31], %58 {strides = array<i32>} : memref<8x256xf32, #tpu.memory_space<vmem>>, vector<8x256xf32>,
    return
  }
  func.func @transform_0(%arg0: i32) -> (i32, i32) {
    %c0_i32 = arith.constant 0 : i32
    %c0_i32_0 = arith.constant 0 : i32
    return %arg0, %c0_i32 : i32, i32
  }
  func.func @transform_1(%arg0: i32) -> (i32, i32) {
    %c0_i32 = arith.constant 0 : i32
    %c0_i32_0 = arith.constant 0 : i32
    return %arg0, %c0_i32 : i32, i32
  }
  func.func @transform_2(%arg0: i32) -> (i32, i32) {
    %c0_i32 = arith.constant 0 : i32
    %c0_i32_0 = arith.constant 0 : i32
    %c0_i32_1 = arith.constant 0 : i32
    return %c0_i32, %c0_i32_0 : i32, i32
  }
  func.func @transform_3(%arg0: i32) -> (i32, i32) {
    %c0_i32 = arith.constant 0 : i32
    %c0_i32_0 = arith.constant 0 : i32
    %c0_i32_1 = arith.constant 0 : i32
    return %c0_i32, %c0_i32_0 : i32, i32
  }
  func.func @transform_4(%arg0: i32) -> (i32, i32) {
    %c0_i32 = arith.constant 0 : i32
    %c0_i32_0 = arith.constant 0 : i32
    return %arg0, %c0_i32 : i32, i32
  }
  func.func @transform_5(%arg0: i32) -> (i32, i32) {
    %c0_i32 = arith.constant 0 : i32
    %c0_i32_0 = arith.constant 0 : i32
    return %arg0, %c0_i32 : i32, i32
  }
}

</mosaic_0001>

<llo_original>
// kernel: tpu_custom_call.1
$region0: #{tpu_custom_call.1}
  #allocation0 [shape = 'u32[]', space=smem, size = 0x4, offset = 0x4, fixed_abs, tag = 'smem constant byte address 0x4 - core index']
  #allocation1 [shape = 'u32[72,128]{1,0:T(1,128)}', space=vmem, size = 0x9000, scoped, tag = 'internal scratch']
  %s0 = inlined_call_operand.hbm [shape: f32[8,256], index: 0, kind: input, shape index: {}]
  %s1 = inlined_call_operand.hbm [shape: f32[8,32], index: 1, kind: input, shape index: {}]
  %s2 = inlined_call_operand.hbm [shape: bf16[672,256], index: 2, kind: input, shape index: {}]
  %s3 = inlined_call_operand.hbm [shape: f32[8,256], index: 3, kind: input, shape index: {}]
  %s4 = inlined_call_operand.hbm [shape: f32[8,256], index: 4, kind: output, shape index: {0}]
  %s5 = inlined_call_operand.hbm [shape: f32[8,64], index: 5, kind: output, shape index: {1}]
  %6 = xla_tuple %s4, %s5
  %s7 = sld [smem:[#allocation0]]
  $region50: #{tpu_custom_call.1} parent=0
    _
  %s9 = ssub.s32 1, %s7
  %s10 = scalar_select 0, %s9, %s7
  $region1: #{tpu_custom_call.1} parent=0
    #allocation2 [shape = 'u8[8192]{0}', space=vmem, size = 0x2000, scoped, tag = 'input window, operand 0, single buffered']
    #allocation3 [shape = 's32[1]{0}', space=sflag, size = 0x4, scoped, tag = 'scoped memory for tpu_custom_call.1']
    #allocation4 [shape = 's32[1]{0}', space=sflag, size = 0x4, scoped, tag = 'scoped memory for tpu_custom_call.1']
    #allocation5 [shape = 'u8[4096]{0}', space=vmem, size = 0x1000, scoped, tag = 'input window, operand 1, single buffered']
    #allocation6 [shape = 's32[1]{0}', space=sflag, size = 0x4, scoped, tag = 'scoped memory for tpu_custom_call.1']
    #allocation7 [shape = 'u8[344064]{0}', space=vmem, size = 0x54000, scoped, tag = 'input window, operand 2, single buffered']
    #allocation8 [shape = 'u8[8192]{0}', space=vmem, size = 0x2000, scoped, tag = 'input window, operand 3, single buffered']
    #allocation9 [shape = 's32[1]{0}', space=sflag, size = 0x4, scoped, tag = 'scoped memory for tpu_custom_call.1']
    #allocation10 [shape = 'u8[8192]{0}', space=vmem, size = 0x2000, scoped, tag = 'output window, operand 0, single buffered']
    #allocation11 [shape = 'u8[4096]{0}', space=vmem, size = 0x1000, scoped, tag = 'output window, operand 1, single buffered']
    #allocation12 [shape = 's32[1]{0}', space=sflag, size = 0x4, scoped, tag = 'scoped memory for tpu_custom_call.1']
    %11 = vsyncpa [#allocation3], 0
    %12 = vsyncpa [#allocation6], 0
    %13 = vsyncpa [#allocation9], 0
    %14 = vsyncpa [#allocation4], 0
    %15 = vsyncpa [#allocation12], 0
    // Predicated region
    $region2: #{tpu_custom_call.1} parent=1 // pred_check
      _
    $region3: #{tpu_custom_call.1} parent=1 // pred_check_branch
      %17 = sbr.rel (0) target = $region5
    $region4: #{tpu_custom_call.1} parent=1 // pred_region
      %19 = vsyncadd [#allocation3], 0
      %s21 = sshll.u32 %s0, 4
      %s22 = int_to_ptr.hbm [resolvable:$true] %s21
      %s23 = sshll.u32 [#allocation2], 4
      %s24 = int_to_ptr.vmem [resolvable:$true] %s23
      %26 = dma.hbm_to_vmem [thread:$0]  %s22, 256, %s24, [#allocation3]
    $region5: #{tpu_custom_call.1} parent=1 // pred_fallthru
      _
    // Predicated region
    $region6: #{tpu_custom_call.1} parent=1 // pred_check
      _
    $region7: #{tpu_custom_call.1} parent=1 // pred_check_branch
      %28 = sbr.rel (0) target = $region9
    $region8: #{tpu_custom_call.1} parent=1 // pred_region
      %30 = vsyncadd [#allocation6], 0
      %s32 = sshll.u32 %s1, 4
      %s33 = int_to_ptr.hbm [resolvable:$true] %s32
      %s34 = sshll.u32 [#allocation5], 4
      %s35 = int_to_ptr.vmem [resolvable:$true] %s34
      %37 = dma.hbm_to_vmem [thread:$0]  %s33, 128, %s35, [#allocation6]
    $region9: #{tpu_custom_call.1} parent=1 // pred_fallthru
      _
    // Predicated region
    $region10: #{tpu_custom_call.1} parent=1 // pred_check
      _
    $region11: #{tpu_custom_call.1} parent=1 // pred_check_branch
      %39 = sbr.rel (0) target = $region13
    $region12: #{tpu_custom_call.1} parent=1 // pred_region
      %41 = vsyncadd [#allocation6], 0
      %s42 = sshll.u32 %s2, 4
      %s43 = int_to_ptr.hbm [resolvable:$true] %s42
      %s44 = sshll.u32 [#allocation7], 4
      %s45 = int_to_ptr.vmem [resolvable:$true] %s44
      %50 = dma.hbm_to_vmem [thread:$0]  %s43, 10752, %s45, [#allocation6], 128, 128, 8
    $region13: #{tpu_custom_call.1} parent=1 // pred_fallthru
      _
    // Predicated region
    $region14: #{tpu_custom_call.1} parent=1 // pred_check
      _
    $region15: #{tpu_custom_call.1} parent=1 // pred_check_branch
      %52 = sbr.rel (0) target = $region17
    $region16: #{tpu_custom_call.1} parent=1 // pred_region
      %54 = vsyncadd [#allocation9], 0
      %s56 = sshll.u32 %s3, 4
      %s57 = int_to_ptr.hbm [resolvable:$true] %s56
      %s58 = sshll.u32 [#allocation8], 4
      %s59 = int_to_ptr.vmem [resolvable:$true] %s58
      %61 = dma.hbm_to_vmem [thread:$0]  %s57, 256, %s59, [#allocation9]
    $region17: #{tpu_custom_call.1} parent=1 // pred_fallthru
      _
    // Predicated region
    $region18: #{tpu_custom_call.1} parent=1 // pred_check
      _
    $region19: #{tpu_custom_call.1} parent=1 // pred_check_branch
      %63 = sbr.rel (0) target = $region21
    $region20: #{tpu_custom_call.1} parent=1 // pred_region
      %65 = dma.done [#allocation3], 256
    $region21: #{tpu_custom_call.1} parent=1 // pred_fallthru
      _
    // Predicated region
    $region22: #{tpu_custom_call.1} parent=1 // pred_check
      _
    $region23: #{tpu_custom_call.1} parent=1 // pred_check_branch
      %67 = sbr.rel (0) target = $region25
    $region24: #{tpu_custom_call.1} parent=1 // pred_region
      %69 = dma.done [#allocation6], 128
    $region25: #{tpu_custom_call.1} parent=1 // pred_fallthru
      _
    // Predicated region
    $region26: #{tpu_custom_call.1} parent=1 // pred_check
      _
    $region27: #{tpu_custom_call.1} parent=1 // pred_check_branch
      %71 = sbr.rel (0) target = $region29
    $region28: #{tpu_custom_call.1} parent=1 // pred_region
      %73 = dma.done [#allocation6], 10752
    $region29: #{tpu_custom_call.1} parent=1 // pred_fallthru
      _
    // Predicated region
    $region30: #{tpu_custom_call.1} parent=1 // pred_check
      _
    $region31: #{tpu_custom_call.1} parent=1 // pred_check_branch
      %75 = sbr.rel (0) target = $region33
    $region32: #{tpu_custom_call.1} parent=1 // pred_region
      %77 = dma.done [#allocation9], 256
    $region33: #{tpu_custom_call.1} parent=1 // pred_fallthru
      _
    %v79 = vld [vmem:[#allocation2] sm:$0xff]
    %v80 = vld [vmem:[#allocation2 + $0x8] sm:$0xff]
    %v81 = vld [vmem:[#allocation7] sm:$0xf]
    %v82 = vld [vmem:[#allocation7 + $0x8] sm:$0xf]
    %v83 = vld [vmem:[#allocation7 + $0x10] sm:$0xf]
    %v84 = vld [vmem:[#allocation7 + $0x18] sm:$0xf]
    %v85 = vld [vmem:[#allocation7 + $0x20] sm:$0xf]
    %v86 = vld [vmem:[#allocation7 + $0x28] sm:$0xf]
    %v87 = vld [vmem:[#allocation7 + $0x30] sm:$0xf]
    %v88 = vld [vmem:[#allocation7 + $0x38] sm:$0xf]
    %v89 = vld [vmem:[#allocation7 + $0x40] sm:$0xf]
    %v90 = vld [vmem:[#allocation7 + $0x48] sm:$0xf]
    %v91 = vld [vmem:[#allocation7 + $0x50] sm:$0xf]
    %v92 = vld [vmem:[#allocation7 + $0x58] sm:$0xf]
    %v93 = vld [vmem:[#allocation7 + $0x60] sm:$0xf]
    %v94 = vld [vmem:[#allocation7 + $0x68] sm:$0xf]
    %v95 = vld [vmem:[#allocation7 + $0x70] sm:$0xf]
    %v96 = vld [vmem:[#allocation7 + $0x78] sm:$0xf]
    %v97 = vld [vmem:[#allocation7 + $0x80] sm:$0xf]
    %v98 = vld [vmem:[#allocation7 + $0x88] sm:$0xf]
    %v99 = vld [vmem:[#allocation7 + $0x90] sm:$0xf]
    %v100 = vld [vmem:[#allocation7 + $0x98] sm:$0xf]
    %v101 = vld [vmem:[#allocation7 + $0xa0] sm:$0xf]
    %v102 = vld [vmem:[#allocation7 + $0xa8] sm:$0xf]
    %v103 = vld [vmem:[#allocation7 + $0xb0] sm:$0xf]
    %v104 = vld [vmem:[#allocation7 + $0xb8] sm:$0xf]
    %v105 = vld [vmem:[#allocation7 + $0xc0] sm:$0xf]
    %v106 = vld [vmem:[#allocation7 + $0xc8] sm:$0xf]
    %v107 = vld [vmem:[#allocation7 + $0xd0] sm:$0xf]
    %v108 = vld [vmem:[#allocation7 + $0xd8] sm:$0xf]
    %v109 = vld [vmem:[#allocation7 + $0xe0] sm:$0xf]
    %v110 = vld [vmem:[#allocation7 + $0xe8] sm:$0xf]
    %v111 = vld [vmem:[#allocation7 + $0xf0] sm:$0xf]
    %v112 = vld [vmem:[#allocation7 + $0xf8] sm:$0xf]
    %v113 = vld [vmem:[#allocation8] ss:$0 sm:$0xff]
    %v114 = vpack.c.bf16 %v79, %v79
    %v115 = vpack.c.bf16 %v80, %v80
    %v148 = vunpack.c.l.b16 %v81
    %v149 = vunpack.c.l.b16 %v82
    %v150 = vunpack.c.l.b16 %v83
    %v151 = vunpack.c.l.b16 %v84
    %v152 = vunpack.c.l.b16 %v85
    %v153 = vunpack.c.l.b16 %v86
    %v154 = vunpack.c.l.b16 %v87
    %v155 = vunpack.c.l.b16 %v88
    %v156 = vunpack.c.l.b16 %v89
    %v157 = vunpack.c.l.b16 %v90
    %v158 = vunpack.c.l.b16 %v91
    %v159 = vunpack.c.l.b16 %v92
    %v160 = vunpack.c.l.b16 %v93
    %v161 = vunpack.c.l.b16 %v94
    %v162 = vunpack.c.l.b16 %v95
    %v163 = vunpack.c.l.b16 %v96
    %v164 = vunpack.c.l.b16 %v97
    %v165 = vunpack.c.l.b16 %v98
    %v166 = vunpack.c.l.b16 %v99
    %v167 = vunpack.c.l.b16 %v100
    %v168 = vunpack.c.l.b16 %v101
    %v169 = vunpack.c.l.b16 %v102
    %v170 = vunpack.c.l.b16 %v103
    %v171 = vunpack.c.l.b16 %v104
    %v172 = vunpack.c.l.b16 %v105
    %v173 = vunpack.c.l.b16 %v106
    %v174 = vunpack.c.l.b16 %v107
    %v175 = vunpack.c.l.b16 %v108
    %v176 = vunpack.c.l.b16 %v109
    %v177 = vunpack.c.l.b16 %v110
    %v178 = vunpack.c.l.b16 %v111
    %v179 = vunpack.c.l.b16 %v112
    %v180 = vpack.c.b16 %v149, %v148
    %v181 = vpack.c.b16 %v151, %v150
    %v182 = vpack.c.b16 %v153, %v152
    %v183 = vpack.c.b16 %v155, %v154
    %v184 = vpack.c.b16 %v157, %v156
    %v185 = vpack.c.b16 %v159, %v158
    %v186 = vpack.c.b16 %v161, %v160
    %v187 = vpack.c.b16 %v163, %v162
    %v188 = vpack.c.b16 %v165, %v164
    %v189 = vpack.c.b16 %v167, %v166
    %v190 = vpack.c.b16 %v169, %v168
    %v191 = vpack.c.b16 %v171, %v170
    %v192 = vpack.c.b16 %v173, %v172
    %v193 = vpack.c.b16 %v175, %v174
    %v194 = vpack.c.b16 %v177, %v176
    %v195 = vpack.c.b16 %v179, %v178
    %212 = vmatpush.bf16.msra.mxu0 %v187
    %213 = vmatpush.bf16.msra.mxu0 %v186
    %214 = vmatpush.bf16.msra.mxu0 %v185
    %215 = vmatpush.bf16.msra.mxu0 %v184
    %216 = vmatpush.bf16.msra.mxu0 %v183
    %217 = vmatpush.bf16.msra.mxu0 %v182
    %218 = vmatpush.bf16.msra.mxu0 %v181
    %219 = vmatpush.bf16.msra.mxu0 %v180
    %220 = vmatmul.bf16.gmra.mxu0 %v114
    %v221 = vpop.f32.mrf.mxu0
    %v222 = vadd.f32 %v113, %v221
    %v223 = vpop.f32.mrf.mxu0
    %224 = vdwg.mxu0
    %225 = vmatpush.bf16.msra.mxu0 %v195
    %226 = vmatpush.bf16.msra.mxu0 %v194
    %227 = vmatpush.bf16.msra.mxu0 %v193
    %228 = vmatpush.bf16.msra.mxu0 %v192
    %229 = vmatpush.bf16.msra.mxu0 %v191
    %230 = vmatpush.bf16.msra.mxu0 %v190
    %231 = vmatpush.bf16.msra.mxu0 %v189
    %232 = vmatpush.bf16.msra.mxu0 %v188
    %233 = vmatmul.bf16.gmra.mxu0 %v115
    %v234 = vpop.f32.mrf.mxu0
    %v235 = vadd.f32 %v222, %v234
    %v236 = vpop.f32.mrf.mxu0
    %237 = vdwg.mxu0
    %v238 = vpack.c.bf16 %v235, %v235
    %v239 = vunpack.c.l.bf16 %v238
    %v240 = vmax.f32 %v239, 0.0
    %v241 = vpack.c.bf16 %v240, %v240
    %v242 = vld [vmem:[#allocation7 + $0x100] sm:$0xf]
    %v243 = vld [vmem:[#allocation7 + $0x108] sm:$0xf]
    %v244 = vld [vmem:[#allocation7 + $0x110] sm:$0xf]
    %v245 = vld [vmem:[#allocation7 + $0x118] sm:$0xf]
    %v246 = vld [vmem:[#allocation7 + $0x120] sm:$0xf]
    %v247 = vld [vmem:[#allocation7 + $0x128] sm:$0xf]
    %v248 = vld [vmem:[#allocation7 + $0x130] sm:$0xf]
    %v249 = vld [vmem:[#allocation7 + $0x138] sm:$0xf]
    %v250 = vld [vmem:[#allocation7 + $0x140] sm:$0xf]
    %v251 = vld [vmem:[#allocation7 + $0x148] sm:$0xf]
    %v252 = vld [vmem:[#allocation7 + $0x150] sm:$0xf]
    %v253 = vld [vmem:[#allocation7 + $0x158] sm:$0xf]
    %v254 = vld [vmem:[#allocation7 + $0x160] sm:$0xf]
    %v255 = vld [vmem:[#allocation7 + $0x168] sm:$0xf]
    %v256 = vld [vmem:[#allocation7 + $0x170] sm:$0xf]
    %v257 = vld [vmem:[#allocation7 + $0x178] sm:$0xf]
    %v258 = vld [vmem:[#allocation8 + $0x1] ss:$0 sm:$0xff]
    %v275 = vunpack.c.l.b16 %v242
    %v276 = vunpack.c.l.b16 %v243
    %v277 = vunpack.c.l.b16 %v244
    %v278 = vunpack.c.l.b16 %v245
    %v279 = vunpack.c.l.b16 %v246
    %v280 = vunpack.c.l.b16 %v247
    %v281 = vunpack.c.l.b16 %v248
    %v282 = vunpack.c.l.b16 %v249
    %v283 = vunpack.c.l.b16 %v250
    %v284 = vunpack.c.l.b16 %v251
    %v285 = vunpack.c.l.b16 %v252
    %v286 = vunpack.c.l.b16 %v253
    %v287 = vunpack.c.l.b16 %v254
    %v288 = vunpack.c.l.b16 %v255
    %v289 = vunpack.c.l.b16 %v256
    %v290 = vunpack.c.l.b16 %v257
    %v291 = vpack.c.b16 %v276, %v275
    %v292 = vpack.c.b16 %v278, %v277
    %v293 = vpack.c.b16 %v280, %v279
    %v294 = vpack.c.b16 %v282, %v281
    %v295 = vpack.c.b16 %v284, %v283
    %v296 = vpack.c.b16 %v286, %v285
    %v297 = vpack.c.b16 %v288, %v287
    %v298 = vpack.c.b16 %v290, %v289
    %307 = vmatpush.bf16.msra.mxu0 %v298
    %308 = vmatpush.bf16.msra.mxu0 %v297
    %309 = vmatpush.bf16.msra.mxu0 %v296
    %310 = vmatpush.bf16.msra.mxu0 %v295
    %311 = vmatpush.bf16.msra.mxu0 %v294
    %312 = vmatpush.bf16.msra.mxu0 %v293
    %313 = vmatpush.bf16.msra.mxu0 %v292
    %314 = vmatpush.bf16.msra.mxu0 %v291
    %315 = vmatmul.bf16.gmra.mxu0 %v241
    %v316 = vpop.f32.mrf.mxu0
    %v317 = vadd.f32 %v258, %v316
    %v318 = vpop.f32.mrf.mxu0
    %319 = vdwg.mxu0
    %v320 = vpack.c.bf16 %v317, %v317
    %v321 = vunpack.c.l.bf16 %v320
    %v322 = vmax.f32 %v321, 0.0
    %v323 = vpack.c.bf16 %v322, %v322
    %v324 = vld [vmem:[#allocation7 + $0x180] sm:$0xf]
    %v325 = vld [vmem:[#allocation7 + $0x188] sm:$0xf]
    %v326 = vld [vmem:[#allocation7 + $0x190] sm:$0xf]
    %v327 = vld [vmem:[#allocation7 + $0x198] sm:$0xf]
    %v328 = vld [vmem:[#allocation7 + $0x1a0] sm:$0xf]
    %v329 = vld [vmem:[#allocation7 + $0x1a8] sm:$0xf]
    %v330 = vld [vmem:[#allocation7 + $0x1b0] sm:$0xf]
    %v331 = vld [vmem:[#allocation7 + $0x1b8] sm:$0xf]
    %v332 = vld [vmem:[#allocation8 + $0x2] ss:$0 sm:$0xff]
    %v341 = vunpack.c.l.b16 %v324
    %v342 = vunpack.c.l.b16 %v325
    %v343 = vunpack.c.l.b16 %v326
    %v344 = vunpack.c.l.b16 %v327
    %v345 = vunpack.c.l.b16 %v328
    %v346 = vunpack.c.l.b16 %v329
    %v347 = vunpack.c.l.b16 %v330
    %v348 = vunpack.c.l.b16 %v331
    %v349 = vpack.c.b16 %v342, %v341
    %v350 = vpack.c.b16 %v344, %v343
    %v351 = vpack.c.b16 %v346, %v345
    %v352 = vpack.c.b16 %v348, %v347
    %vm357 = vcmask 523264
    %v359 = vsel %vm357, %v323, 0
    %361 = vmatpush.bf16.msra.mxu0 0
    %362 = vmatpush.bf16.msra.mxu0 0
    %363 = vmatpush.bf16.msra.mxu0 0
    %364 = vmatpush.bf16.msra.mxu0 0
    %365 = vmatpush.bf16.msra.mxu0 %v352
    %366 = vmatpush.bf16.msra.mxu0 %v351
    %367 = vmatpush.bf16.msra.mxu0 %v350
    %368 = vmatpush.bf16.msra.mxu0 %v349
    %369 = vmatmul.bf16.gmra.mxu0 %v359
    %v370 = vpop.f32.mrf.mxu0
    %v371 = vadd.f32 %v332, %v370
    %v372 = vpop.f32.mrf.mxu0
    %373 = vdwg.mxu0
    %374 = vst.msk [vmem:[#allocation11] sm:$0xff] %vm357, %v371
    %v375 = vld [vmem:[#allocation5] sm:$0xff]
    %v376 = vmul.f32 %v371, 0.5
    %v377 = vmul.f32 %v376, 1.442695
    %v378 = vpow.pop %v377
    %380 = vrot.lane.b32.xlu0 %v378, 96
    %v381 = vpop.permute.xlu0 %380
    %v383 = vmul.f32 %v375, %v381
    %v384 = vadd.f32 %v371, %v383
    %v385 = vld [vmem:[#allocation7 + $0x1c0] sm:$0xf]
    %v386 = vld [vmem:[#allocation7 + $0x1c8] sm:$0xf]
    %v387 = vld [vmem:[#allocation7 + $0x1d0] sm:$0xf]
    %v388 = vld [vmem:[#allocation7 + $0x1d8] sm:$0xf]
    %v389 = vld [vmem:[#allocation8 + $0x3] ss:$0 sm:$0xff]
    %v390 = vpack.c.bf16 %v384, %v384
    %v395 = vunpack.c.l.b16 %v385
    %v396 = vunpack.c.l.b16 %v386
    %v397 = vunpack.c.l.b16 %v387
    %v398 = vunpack.c.l.b16 %v388
    %v399 = vpack.c.b16 %v396, %v395
    %v400 = vpack.c.b16 %v398, %v397
    %vm403 = vcmask 261120
    %v405 = vsel %vm403, %v390, 0
    %407 = vmatpush.bf16.msra.mxu0 0
    %408 = vmatpush.bf16.msra.mxu0 0
    %409 = vmatpush.bf16.msra.mxu0 0
    %410 = vmatpush.bf16.msra.mxu0 0
    %411 = vmatpush.bf16.msra.mxu0 0
    %412 = vmatpush.bf16.msra.mxu0 0
    %413 = vmatpush.bf16.msra.mxu0 %v400
    %414 = vmatpush.bf16.msra.mxu0 %v399
    %415 = vmatmul.bf16.gmra.mxu0 %v405
    %v416 = vpop.f32.mrf.mxu0
    %v417 = vadd.f32 %v389, %v416
    %v418 = vpop.f32.mrf.mxu0
    %419 = vdwg.mxu0
    %v420 = vpack.c.bf16 %v417, %v417
    %v421 = vunpack.c.l.bf16 %v420
    %v422 = vmax.f32 %v421, 0.0
    %v423 = vpack.c.bf16 %v422, %v422
    %v424 = vld [vmem:[#allocation7 + $0x1e0] sm:$0xf]
    %v425 = vld [vmem:[#allocation7 + $0x1e8] sm:$0xf]
    %v426 = vld [vmem:[#allocation7 + $0x1f0] sm:$0xf]
    %v427 = vld [vmem:[#allocation7 + $0x1f8] sm:$0xf]
    %v428 = vld [vmem:[#allocation7 + $0x200] sm:$0xf]
    %v429 = vld [vmem:[#allocation7 + $0x208] sm:$0xf]
    %v430 = vld [vmem:[#allocation7 + $0x210] sm:$0xf]
    %v431 = vld [vmem:[#allocation7 + $0x218] sm:$0xf]
    %v432 = vld [vmem:[#allocation8 + $0x4] ss:$0 sm:$0xff]
    %v441 = vunpack.c.l.b16 %v424
    %v442 = vunpack.c.l.b16 %v425
    %v443 = vunpack.c.l.b16 %v426
    %v444 = vunpack.c.l.b16 %v427
    %v445 = vunpack.c.l.b16 %v428
    %v446 = vunpack.c.l.b16 %v429
    %v447 = vunpack.c.l.b16 %v430
    %v448 = vunpack.c.l.b16 %v431
    %v449 = vpack.c.b16 %v442, %v441
    %v450 = vpack.c.b16 %v444, %v443
    %v451 = vpack.c.b16 %v446, %v445
    %v452 = vpack.c.b16 %v448, %v447
    %v458 = vsel %vm357, %v423, 0
    %460 = vmatpush.bf16.msra.mxu0 0
    %461 = vmatpush.bf16.msra.mxu0 0
    %462 = vmatpush.bf16.msra.mxu0 0
    %463 = vmatpush.bf16.msra.mxu0 0
    %464 = vmatpush.bf16.msra.mxu0 %v452
    %465 = vmatpush.bf16.msra.mxu0 %v451
    %466 = vmatpush.bf16.msra.mxu0 %v450
    %467 = vmatpush.bf16.msra.mxu0 %v449
    %468 = vmatmul.bf16.gmra.mxu0 %v458
    %v469 = vpop.f32.mrf.mxu0
    %v470 = vadd.f32 %v432, %v469
    %v471 = vpop.f32.mrf.mxu0
    %472 = vdwg.mxu0
    %v473 = vpack.c.bf16 %v470, %v470
    %v474 = vunpack.c.l.bf16 %v473
    %v475 = vmax.f32 %v474, 0.0
    %v476 = vpack.c.bf16 %v475, %v475
    %v477 = vld [vmem:[#allocation7 + $0x220] sm:$0xff]
    %v478 = vld [vmem:[#allocation7 + $0x228] sm:$0xff]
    %v479 = vld [vmem:[#allocation7 + $0x230] sm:$0xff]
    %v480 = vld [vmem:[#allocation7 + $0x238] sm:$0xff]
    %v481 = vld [vmem:[#allocation7 + $0x240] sm:$0xff]
    %v482 = vld [vmem:[#allocation7 + $0x248] sm:$0xff]
    %v483 = vld [vmem:[#allocation7 + $0x250] sm:$0xff]
    %v484 = vld [vmem:[#allocation7 + $0x258] sm:$0xff]
    %v485 = vld [vmem:[#allocation7 + $0x260] sm:$0xff]
    %v486 = vld [vmem:[#allocation7 + $0x268] sm:$0xff]
    %v487 = vld [vmem:[#allocation7 + $0x270] sm:$0xff]
    %v488 = vld [vmem:[#allocation7 + $0x278] sm:$0xff]
    %v489 = vld [vmem:[#allocation7 + $0x280] sm:$0xff]
    %v490 = vld [vmem:[#allocation7 + $0x288] sm:$0xff]
    %v491 = vld [vmem:[#allocation7 + $0x290] sm:$0xff]
    %v492 = vld [vmem:[#allocation7 + $0x298] sm:$0xff]
    %s493 = scalar_lea.vmem [#allocation8], 5
    %v494 = vld [vmem:[%s493] ss:$8 sm:$0x3]
    %v496 = vperm.slane %v494, 0
    %v497 = vperm.slane %v494, 1
    %v516 = vunpack.c.l.b16 %v477
    %v517 = vunpack.c.h.b16 %v477
    %v518 = vunpack.c.l.b16 %v478
    %v519 = vunpack.c.h.b16 %v478
    %v520 = vunpack.c.l.b16 %v479
    %v521 = vunpack.c.h.b16 %v479
    %v522 = vunpack.c.l.b16 %v480
    %v523 = vunpack.c.h.b16 %v480
    %v524 = vunpack.c.l.b16 %v481
    %v525 = vunpack.c.h.b16 %v481
    %v526 = vunpack.c.l.b16 %v482
    %v527 = vunpack.c.h.b16 %v482
    %v528 = vunpack.c.l.b16 %v483
    %v529 = vunpack.c.h.b16 %v483
    %v530 = vunpack.c.l.b16 %v484
    %v531 = vunpack.c.h.b16 %v484
    %v532 = vunpack.c.l.b16 %v485
    %v533 = vunpack.c.h.b16 %v485
    %v534 = vunpack.c.l.b16 %v486
    %v535 = vunpack.c.h.b16 %v486
    %v536 = vunpack.c.l.b16 %v487
    %v537 = vunpack.c.h.b16 %v487
    %v538 = vunpack.c.l.b16 %v488
    %v539 = vunpack.c.h.b16 %v488
    %v540 = vunpack.c.l.b16 %v489
    %v541 = vunpack.c.h.b16 %v489
    %v542 = vunpack.c.l.b16 %v490
    %v543 = vunpack.c.h.b16 %v490
    %v544 = vunpack.c.l.b16 %v491
    %v545 = vunpack.c.h.b16 %v491
    %v546 = vunpack.c.l.b16 %v492
    %v547 = vunpack.c.h.b16 %v492
    %v548 = vpack.c.b16 %v518, %v516
    %v549 = vpack.c.b16 %v519, %v517
    %v550 = vpack.c.b16 %v522, %v520
    %v551 = vpack.c.b16 %v523, %v521
    %v552 = vpack.c.b16 %v526, %v524
    %v553 = vpack.c.b16 %v527, %v525
    %v554 = vpack.c.b16 %v530, %v528
    %v555 = vpack.c.b16 %v531, %v529
    %v556 = vpack.c.b16 %v534, %v532
    %v557 = vpack.c.b16 %v535, %v533
    %v558 = vpack.c.b16 %v538, %v536
    %v559 = vpack.c.b16 %v539, %v537
    %v560 = vpack.c.b16 %v542, %v540
    %v561 = vpack.c.b16 %v543, %v541
    %v562 = vpack.c.b16 %v546, %v544
    %v563 = vpack.c.b16 %v547, %v545
    %580 = vmatpush.bf16.msra.mxu0 %v562
    %581 = vmatpush.bf16.msra.mxu0 %v560
    %582 = vmatpush.bf16.msra.mxu0 %v558
    %583 = vmatpush.bf16.msra.mxu0 %v556
    %584 = vmatpush.bf16.msra.mxu0 %v554
    %585 = vmatpush.bf16.msra.mxu0 %v552
    %586 = vmatpush.bf16.msra.mxu0 %v550
    %587 = vmatpush.bf16.msra.mxu0 %v548
    %588 = vmatmul.bf16.gmra.mxu0 %v476
    %v589 = vpop.f32.mrf.mxu0
    %v590 = vadd.f32 %v496, %v589
    %v591 = vpop.f32.mrf.mxu0
    %592 = vdwg.mxu0
    %593 = vmatpush.bf16.msra.mxu0 %v563
    %594 = vmatpush.bf16.msra.mxu0 %v561
    %595 = vmatpush.bf16.msra.mxu0 %v559
    %596 = vmatpush.bf16.msra.mxu0 %v557
    %597 = vmatpush.bf16.msra.mxu0 %v555
    %598 = vmatpush.bf16.msra.mxu0 %v553
    %599 = vmatpush.bf16.msra.mxu0 %v551
    %600 = vmatpush.bf16.msra.mxu0 %v549
    %601 = vmatmul.bf16.gmra.mxu0 %v476
    %v602 = vpop.f32.mrf.mxu0
    %v603 = vadd.f32 %v497, %v602
    %v604 = vpop.f32.mrf.mxu0
    %605 = vdwg.mxu0
    %v606 = vxor.u32 %v590, 2147483648
    %v607 = vxor.u32 %v603, 2147483648
    %v608 = vmul.f32 %v606, 1.442695
    %v609 = vpow.pop %v608
    %v610 = vmul.f32 %v607, 1.442695
    %v611 = vpow.pop %v610
    %v612 = vadd.f32 %v609, 1.0
    %v613 = vadd.f32 %v611, 1.0
    %v614 = vrcp.pop %v612
    %v615 = vmul.f32 %v612, %v614
    %v616 = vsub.f32 1.0, %v615
    %v617 = vmul.f32 %v614, %v616
    %v618 = vadd.f32 %v614, %v617
    %vm619 = vweird.f32 %v612
    %vm620 = vweird.f32 %v614
    %vm621 = vmor %vm619, %vm620
    %v622 = vsel %vm621, %v614, %v618
    %v623 = vand.u32 2147483647, %v612
    %vm624 = vcmp.eq.f32.partialorder %v623, 8.507059e+37
    %v625 = vand.u32 %v612, 2147483648
    %v626 = vor.u32 1.1754944e-38, %v625
    %v627 = vsel %vm624, %v626, %v622
    %v628 = vmul.f32 1.0, %v627
    %v629 = vrcp.pop %v613
    %v630 = vmul.f32 %v613, %v629
    %v631 = vsub.f32 1.0, %v630
    %v632 = vmul.f32 %v629, %v631
    %v633 = vadd.f32 %v629, %v632
    %vm634 = vweird.f32 %v613
    %vm635 = vweird.f32 %v629
    %vm636 = vmor %vm634, %vm635
    %v637 = vsel %vm636, %v629, %v633
    %v638 = vand.u32 2147483647, %v613
    %vm639 = vcmp.eq.f32.partialorder %v638, 8.507059e+37
    %v640 = vand.u32 %v613, 2147483648
    %v641 = vor.u32 1.1754944e-38, %v640
    %v642 = vsel %vm639, %v641, %v637
    %v643 = vmul.f32 1.0, %v642
    %644 = vst [vmem:[#allocation10] sm:$0xff] %v628
    %645 = vst [vmem:[#allocation10 + $0x8] sm:$0xff] %v643
    // Predicated region
    $region34: #{tpu_custom_call.1} parent=1 // pred_check
      _
    $region35: #{tpu_custom_call.1} parent=1 // pred_check_branch
      %647 = sbr.rel (0) target = $region37
    $region36: #{tpu_custom_call.1} parent=1 // pred_region
      %649 = vsyncadd [#allocation4], 0
      %s651 = sshll.u32 [#allocation10], 4
      %s652 = int_to_ptr.vmem [resolvable:$true] %s651
      %s653 = sshll.u32 %s4, 4
      %s654 = int_to_ptr.hbm [resolvable:$true] %s653
      %656 = dma.vmem_to_hbm [thread:$0]  %s652, 256, %s654, [#allocation4]
    $region37: #{tpu_custom_call.1} parent=1 // pred_fallthru
      _
    // Predicated region
    $region38: #{tpu_custom_call.1} parent=1 // pred_check
      _
    $region39: #{tpu_custom_call.1} parent=1 // pred_check_branch
      %658 = sbr.rel (0) target = $region41
    $region40: #{tpu_custom_call.1} parent=1 // pred_region
      %660 = vsyncadd [#allocation12], 0
      %s662 = sshll.u32 [#allocation11], 4
      %s663 = int_to_ptr.vmem [resolvable:$true] %s662
      %s664 = sshll.u32 %s5, 4
      %s665 = int_to_ptr.hbm [resolvable:$true] %s664
      %667 = dma.vmem_to_hbm [thread:$0]  %s663, 128, %s665, [#allocation12]
    $region41: #{tpu_custom_call.1} parent=1 // pred_fallthru
      _
    // Predicated region
    $region42: #{tpu_custom_call.1} parent=1 // pred_check
      _
    $region43: #{tpu_custom_call.1} parent=1 // pred_check_branch
      %669 = sbr.rel (0) target = $region45
    $region44: #{tpu_custom_call.1} parent=1 // pred_region
      %671 = dma.done [#allocation4], 256
    $region45: #{tpu_custom_call.1} parent=1 // pred_fallthru
      _
    // Predicated region
    $region46: #{tpu_custom_call.1} parent=1 // pred_check
      _
    $region47: #{tpu_custom_call.1} parent=1 // pred_check_branch
      %673 = sbr.rel (0) target = $region49
    $region48: #{tpu_custom_call.1} parent=1 // pred_region
      %675 = dma.done [#allocation12], 128
    $region49: #{tpu_custom_call.1} parent=1 // pred_fallthru
      _
    %676 = vsyncpa [#allocation3], 1
    %677 = vsyncpa [#allocation6], 1
    %678 = vsyncpa [#allocation9], 1
    %679 = vsyncpa [#allocation4], 1
    %680 = vsyncpa [#allocation12], 1

</llo_original>
